<compile_context>
chip_gen: v6e
topology: v6e:2x2x1
jax: 0.10.0
libtpu: 0.0.40
codegen_flags: <defaults>
</compile_context>

<pallas_src>
import jax
import jax.numpy as jnp
from jax.experimental import pallas as pl
from jax.experimental.pallas import tpu as pltpu


def _round_up(x, m):
    return (x + m - 1) // m * m


def _mlp_q_kernel(x_ref, w_ref, b_ref, out_ref):
    # x_ref:   [TB, IN_PAD]     bf16, padded concat(obs, act) tile (IN_PAD = 16)
    # w_ref:   [ROWS, 3*D]      bf16, packed (w1 | w2 | w3), zero-padded, VMEM-resident
    # b_ref:   [1, 3*D]         f32,  packed (b1 | b2 | b3), zero-padded, VMEM-resident
    # out_ref: [1, TB]          f32,  Q value per batch row (lane-dense)
    d = w_ref.shape[1] // 3
    in_pad = x_ref.shape[1]                 # sublane-aligned (multiple of 16)

    x = x_ref[...]
    # Layer 1: Linear + ReLU  (row slice of the slab is sublane-aligned -> no relayout)
    h = jnp.dot(x, w_ref[0:in_pad, 0:d],
                preferred_element_type=jnp.float32) + b_ref[:, 0:d]
    h = jnp.maximum(h, 0.0).astype(w_ref.dtype)
    # Layer 2: Linear + ReLU
    h = jnp.dot(h, w_ref[:, d:2 * d],
                preferred_element_type=jnp.float32) + b_ref[:, d:2 * d]
    h = jnp.maximum(h, 0.0).astype(w_ref.dtype)
    # Output layer: Linear (identity output activation)
    q = jnp.dot(h, w_ref[:, 2 * d:3 * d],
                preferred_element_type=jnp.float32) + b_ref[:, 2 * d:3 * d]
    # Only column 0 is the Q value; relayout [TB, 1] -> [1, TB] (XLU) for a
    # lane-dense, unmasked store.
    out_ref[...] = jnp.transpose(q[:, 0:1])


def pack_params(params, sizes, lane=128):
    """Pack the 3 weight matrices / biases into single zero-padded slabs.

    Hidden/output dims are padded to 128 lanes; the (tiny) input dim is only
    padded to a multiple of 16 sublanes so layer-1 can use a row slice.
    """
    n_layers = len(sizes) - 1
    assert n_layers == 3, "kernel implements the 2-hidden-layer MLPQFunction"
    in_pad = _round_up(sizes[0], 16)
    d_pad = _round_up(max(sizes[1:]), lane)
    rows = max(in_pad, d_pad)

    w_cols, b_cols = [], []
    for j in range(n_layers):
        fan_in, fan_out = sizes[j], sizes[j + 1]
        w = params[f"w{j + 1}"]                        # [in, out]
        b = params[f"b{j + 1}"]                        # [out]
        w_cols.append(jnp.pad(w, ((0, rows - fan_in), (0, d_pad - fan_out))))
        b_cols.append(jnp.pad(b, (0, d_pad - fan_out)))
    w_slab = jnp.concatenate(w_cols, axis=1).astype(jnp.bfloat16)   # [rows, 3*d_pad]
    b_slab = jnp.concatenate(b_cols)[None, :].astype(jnp.float32)   # [1, 3*d_pad]
    return w_slab, b_slab, in_pad, d_pad


def _choose_tile(B):
    """Return (TB, B_pad). Single grid step for small batches; for large
    batches, 128-aligned tiles up to 2048 rows with >= 2 grid steps so the
    'parallel' axis can shard across v7x's 2 TensorCores."""
    b = _round_up(max(B, 16), 16)          # bf16 sublane packing stays dense
    if b <= 256:
        return b, b                        # block == full array (any size OK)
    tb = min(2048, _round_up((b + 1) // 2, 128))
    b_pad = _round_up(b, tb)
    return tb, b_pad


def mlp_q_forward(obs, act, w_slab, b_slab, in_pad):
    """obs: [B, obs_dim], act: [B, act_dim]. Returns q: [B, 1] (float32)."""
    B = obs.shape[0]
    in_dim = obs.shape[1] + act.shape[1]
    assert in_dim <= in_pad

    TB, B_pad = _choose_tile(B)
    x = jnp.concatenate([obs, act], axis=-1)
    x_pad = jnp.pad(x, ((0, B_pad - B), (0, in_pad - in_dim))).astype(jnp.bfloat16)

    grid = (B_pad // TB,)

    out = pl.pallas_call(
        _mlp_q_kernel,
        out_shape=jax.ShapeDtypeStruct((1, B_pad), jnp.float32),
        grid_spec=pltpu.PrefetchScalarGridSpec(
            num_scalar_prefetch=0,
            grid=grid,
            in_specs=[
                # activations: tiled over batch, only 16 lanes wide
                pl.BlockSpec((TB, in_pad), lambda i: (i, 0)),
                # weights / biases: constant block index -> VMEM-resident
                pl.BlockSpec(w_slab.shape, lambda i: (0, 0)),
                pl.BlockSpec(b_slab.shape, lambda i: (0, 0)),
            ],
            # one lane-dense Q row per grid step
            out_specs=pl.BlockSpec((1, TB), lambda i: (0, i)),
        ),
        compiler_params=pltpu.CompilerParams(
            dimension_semantics=("parallel",)),
    )(x_pad, w_slab, b_slab)

    return out[0, :B][:, None]             # [B, 1]


def init_params(key, sizes):
    """Mimics PyTorch nn.Linear default init U(-1/sqrt(in), 1/sqrt(in)).
    Weights stored as [in_features, out_features]; biases as [out_features]."""
    params = {}
    for j in range(len(sizes) - 1):
        fan_in, fan_out = sizes[j], sizes[j + 1]
        key, kw, kb = jax.random.split(key, 3)
        bound = 1.0 / jnp.sqrt(jnp.float32(fan_in))
        params[f"w{j + 1}"] = jax.random.uniform(
            kw, (fan_in, fan_out), jnp.float32, -bound, bound)
        params[f"b{j + 1}"] = jax.random.uniform(
            kb, (fan_out,), jnp.float32, -bound, bound)
    return params


def reference_forward(obs, act, params):
    x = jnp.concatenate([obs, act], axis=-1)
    h = jnp.maximum(x @ params["w1"] + params["b1"], 0.0)
    h = jnp.maximum(h @ params["w2"] + params["b2"], 0.0)
    return h @ params["w3"] + params["b3"]            # [B, 1]


if __name__ == "__main__":
    # Shapes consistent with MLPQFunction(obs_dim=11, act_dim=3, hidden_sizes=(32, 32), ReLU)
    obs_dim, act_dim = 11, 3
    hidden_sizes = (32, 32)
    sizes = [obs_dim + act_dim] + list(hidden_sizes) + [1]

    key = jax.random.PRNGKey(0)
    key, k_params = jax.random.split(key)
    params = init_params(k_params, sizes)
    w_slab, b_slab, in_pad, _ = pack_params(params, sizes)

    # bf16 operands (f32 accumulation) -> compare against f32 reference with a
    # bf16-appropriate tolerance.
    for batch in (8, 300):                 # single-step and multi-step grid paths
        key, k_obs, k_act = jax.random.split(key, 3)
        obs = jax.random.normal(k_obs, (batch, obs_dim), jnp.float32)
        act = jax.random.normal(k_act, (batch, act_dim), jnp.float32)

        q = mlp_q_forward(obs, act, w_slab, b_slab, in_pad)
        q = jax.block_until_ready(q)

        ref = reference_forward(obs, act, params)
        assert q.shape == (batch, 1), q.shape
        assert jnp.allclose(q, ref, atol=2e-2, rtol=2e-2), \
            f"mismatch vs JAX reference (batch={batch})"

    print("KERNEL_OK")
</pallas_src>

<mosaic_0001>
module attributes {stable_mosaic.version = 11 : i64} {
  func.func @_mlp_q_kernel(%arg0: i32, %arg1: memref<16x16xbf16, #tpu.memory_space<vmem>>, %arg2: memref<128x384xbf16, #tpu.memory_space<vmem>>, %arg3: memref<1x384xf32, #tpu.memory_space<vmem>>, %arg4: memref<1x16xf32, #tpu.memory_space<vmem>>) attributes {dimension_semantics = [#tpu.dimension_semantics<parallel>], iteration_bounds = array<i64: 1>, scalar_prefetch = 0 : i64, scratch_operands = 0 : i64, tpu.core_type = #tpu.core_type<tc>, window_params = [{transform_indices = @transform_0, window_bounds = array<i64: 16, 16>}, {pipeline_mode = #tpu.pipeline_mode<synchronous>, transform_indices = @transform_1, window_bounds = array<i64: 128, 384>}, {pipeline_mode = #tpu.pipeline_mode<synchronous>, transform_indices = @transform_2, window_bounds = array<i64: 1, 384>}, {transform_indices = @transform_3, window_bounds = array<i64: 1, 16>}]} {
    %c0 = arith.constant 0 : index
    %c0_0 = arith.constant 0 : index
    %0 = vector.load %arg1[%c0, %c0_0] : memref<16x16xbf16, #tpu.memory_space<vmem>>, vector<16x16xbf16>
    %c0_1 = arith.constant 0 : index
    %c0_2 = arith.constant 0 : index
    %1 = vector.load %arg2[%c0_1, %c0_2] : memref<128x384xbf16, #tpu.memory_space<vmem>>, vector<16x128xbf16>
    %cst = arith.constant dense<0.000000e+00> : vector<16x128xf32>
    %2 = tpu.matmul %0, %1, %cst {dimension_numbers = #tpu.dot_dimension_numbers<[1], [0], [0], [1], [0, 0, 1, 1], [], []>} : vector<16x16xbf16>, vector<16x128xbf16>, vector<16x128xf32> -> vector<16x128xf32>
    %c0_3 = arith.constant 0 : index
    %c0_4 = arith.constant 0 : index
    %3 = vector.load %arg3[%c0_3, %c0_4] : memref<1x384xf32, #tpu.memory_space<vmem>>, vector<1x128xf32>
    %4 = vector.broadcast %3 : vector<1x128xf32> to vector<16x128xf32>
    %5 = arith.addf %2, %4 : vector<16x128xf32>
    %cst_5 = arith.constant 0.000000e+00 : f32
    %6 = vector.broadcast %cst_5 : f32 to vector<16x128xf32>
    %7 = arith.maximumf %5, %6 : vector<16x128xf32>
    %8 = arith.truncf %7 : vector<16x128xf32> to vector<16x128xbf16>
    %c0_6 = arith.constant 0 : index
    %c128 = arith.constant 128 : index
    %9 = vector.load %arg2[%c0_6, %c128] : memref<128x384xbf16, #tpu.memory_space<vmem>>, vector<128x128xbf16>
    %cst_7 = arith.constant dense<0.000000e+00> : vector<16x128xf32>
    %10 = tpu.matmul %8, %9, %cst_7 {dimension_numbers = #tpu.dot_dimension_numbers<[1], [0], [0], [1], [0, 0, 1, 1], [], []>} : vector<16x128xbf16>, vector<128x128xbf16>, vector<16x128xf32> -> vector<16x128xf32>
    %c0_8 = arith.constant 0 : index
    %c128_9 = arith.constant 128 : index
    %11 = vector.load %arg3[%c0_8, %c128_9] : memref<1x384xf32, #tpu.memory_space<vmem>>, vector<1x128xf32>
    %12 = vector.broadcast %11 : vector<1x128xf32> to vector<16x128xf32>
    %13 = arith.addf %10, %12 : vector<16x128xf32>
    %cst_10 = arith.constant 0.000000e+00 : f32
    %14 = vector.broadcast %cst_10 : f32 to vector<16x128xf32>
    %15 = arith.maximumf %13, %14 : vector<16x128xf32>
    %16 = arith.truncf %15 : vector<16x128xf32> to vector<16x128xbf16>
    %c0_11 = arith.constant 0 : index
    %c256 = arith.constant 256 : index
    %17 = vector.load %arg2[%c0_11, %c256] : memref<128x384xbf16, #tpu.memory_space<vmem>>, vector<128x128xbf16>
    %cst_12 = arith.constant dense<0.000000e+00> : vector<16x128xf32>
    %18 = tpu.matmul %16, %17, %cst_12 {dimension_numbers = #tpu.dot_dimension_numbers<[1], [0], [0], [1], [0, 0, 1, 1], [], []>} : vector<16x128xbf16>, vector<128x128xbf16>, vector<16x128xf32> -> vector<16x128xf32>
    %c0_13 = arith.constant 0 : index
    %c256_14 = arith.constant 256 : index
    %19 = vector.load %arg3[%c0_13, %c256_14] : memref<1x384xf32, #tpu.memory_space<vmem>>, vector<1x128xf32>
    %20 = vector.broadcast %19 : vector<1x128xf32> to vector<16x128xf32>
    %21 = arith.addf %18, %20 : vector<16x128xf32>
    %22 = vector.extract_strided_slice %21 {offsets = [0, 0], sizes = [16, 1], strides = [1, 1]} : vector<16x128xf32> to vector<16x1xf32>
    %23 = tpu.transpose %22, [1, 0] : vector<16x1xf32> -> vector<1x16xf32>
    %c0_15 = arith.constant 0 : index
    %c0_16 = arith.constant 0 : index
    %24 = vector.load %arg4[%c0_15, %c0_16] : memref<1x16xf32, #tpu.memory_space<vmem>>, vector<1x16xf32>
    tpu.vector_store %arg4[%c0_15, %c0_16], %23 {strides = array<i32>} : memref<1x16xf32, #tpu.memory_space<vmem>>, vector<1x16xf32>,
    return
  }
  func.func @transform_0(%arg0: i32) -> (i32, i32) {
    %c0_i32 = arith.constant 0 : i32
    %c0_i32_0 = arith.constant 0 : i32
    return %arg0, %c0_i32 : i32, i32
  }
  func.func @transform_1(%arg0: i32) -> (i32, i32) {
    %c0_i32 = arith.constant 0 : i32
    %c0_i32_0 = arith.constant 0 : i32
    %c0_i32_1 = arith.constant 0 : i32
    return %c0_i32, %c0_i32_0 : i32, i32
  }
  func.func @transform_2(%arg0: i32) -> (i32, i32) {
    %c0_i32 = arith.constant 0 : i32
    %c0_i32_0 = arith.constant 0 : i32
    %c0_i32_1 = arith.constant 0 : i32
    return %c0_i32, %c0_i32_0 : i32, i32
  }
  func.func @transform_3(%arg0: i32) -> (i32, i32) {
    %c0_i32 = arith.constant 0 : i32
    %c0_i32_0 = arith.constant 0 : i32
    return %c0_i32, %arg0 : i32, i32
  }
}

</mosaic_0001>

<llo_original>
// kernel: tpu_custom_call.1
$region0: #{tpu_custom_call.1}
  #allocation0 [shape = 'u32[]', space=smem, size = 0x4, offset = 0x4, fixed_abs, tag = 'smem constant byte address 0x4 - core index']
  #allocation1 [shape = 'u32[144,128]{1,0:T(1,128)}', space=vmem, size = 0x12000, scoped, tag = 'internal scratch']
  %s0 = inlined_call_operand.hbm [shape: bf16[16,16], index: 0, kind: input, shape index: {}]
  %s1 = inlined_call_operand.hbm [shape: bf16[128,384], index: 1, kind: input, shape index: {}]
  %s2 = inlined_call_operand.vmem [shape: f32[1,384], index: 2, kind: input, shape index: {}]
  %s3 = inlined_call_operand.hbm [shape: f32[1,16], index: 3, kind: output, shape index: {}]
  %s4 = sld [smem:[#allocation0]]
  $region30: #{tpu_custom_call.1} parent=0
    _
  %s6 = ssub.s32 1, %s4
  %s7 = scalar_select 0, %s6, %s4
  $region1: #{tpu_custom_call.1} parent=0
    #allocation2 [shape = 'u8[4096]{0}', space=vmem, size = 0x1000, scoped, tag = 'input window, operand 0, single buffered']
    #allocation3 [shape = 's32[1]{0}', space=sflag, size = 0x4, scoped, tag = 'scoped memory for tpu_custom_call.1']
    #allocation4 [shape = 's32[1]{0}', space=sflag, size = 0x4, scoped, tag = 'scoped memory for tpu_custom_call.1']
    #allocation5 [shape = 'u8[98304]{0}', space=vmem, size = 0x18000, scoped, tag = 'input window, operand 1, single buffered']
    #allocation6 [shape = 's32[1]{0}', space=sflag, size = 0x4, scoped, tag = 'scoped memory for tpu_custom_call.1']
    #allocation7 [shape = 'u8[512]{0}', space=vmem, size = 0x400, scoped, tag = 'output window, operand 0, single buffered']
    %8 = vsyncpa [#allocation3], 0
    %9 = vsyncpa [#allocation6], 0
    %10 = vsyncpa [#allocation4], 0
    // Predicated region
    $region2: #{tpu_custom_call.1} parent=1 // pred_check
      _
    $region3: #{tpu_custom_call.1} parent=1 // pred_check_branch
      %12 = sbr.rel (0) target = $region5
    $region4: #{tpu_custom_call.1} parent=1 // pred_region
      %s14 = ssub.s32 128, 128
      %15 = vsyncadd [#allocation3], %s14
      %s16 = sshll.u32 [#allocation2], 4
      %s17 = int_to_ptr.vmem [resolvable:$true] %s16
      %22 = dma.hbm_to_vmem [thread:$0]  %s0, 128, %s17, [#allocation3], 64, 64, 4
    $region5: #{tpu_custom_call.1} parent=1 // pred_fallthru
      _
    // Predicated region
    $region6: #{tpu_custom_call.1} parent=1 // pred_check
      _
    $region7: #{tpu_custom_call.1} parent=1 // pred_check_branch
      %24 = sbr.rel (0) target = $region9
    $region8: #{tpu_custom_call.1} parent=1 // pred_region
      %s26 = ssub.s32 3072, 3072
      %27 = vsyncadd [#allocation6], %s26
      %s28 = sshll.u32 [#allocation5], 4
      %s29 = int_to_ptr.vmem [resolvable:$true] %s28
      %34 = dma.hbm_to_vmem [thread:$0]  %s1, 3072, %s29, [#allocation6], 192, 192, 12
    $region9: #{tpu_custom_call.1} parent=1 // pred_fallthru
      _
    // Predicated region
    $region10: #{tpu_custom_call.1} parent=1 // pred_check
      _
    $region11: #{tpu_custom_call.1} parent=1 // pred_check_branch
      %36 = sbr.rel (0) target = $region13
    $region12: #{tpu_custom_call.1} parent=1 // pred_region
      _
    $region13: #{tpu_custom_call.1} parent=1 // pred_fallthru
      _
    // Predicated region
    $region14: #{tpu_custom_call.1} parent=1 // pred_check
      _
    $region15: #{tpu_custom_call.1} parent=1 // pred_check_branch
      %38 = sbr.rel (0) target = $region17
    $region16: #{tpu_custom_call.1} parent=1 // pred_region
      %39 = dma.done [#allocation3], 128
    $region17: #{tpu_custom_call.1} parent=1 // pred_fallthru
      _
    // Predicated region
    $region18: #{tpu_custom_call.1} parent=1 // pred_check
      _
    $region19: #{tpu_custom_call.1} parent=1 // pred_check_branch
      %41 = sbr.rel (0) target = $region21
    $region20: #{tpu_custom_call.1} parent=1 // pred_region
      %42 = dma.done [#allocation6], 3072
    $region21: #{tpu_custom_call.1} parent=1 // pred_fallthru
      _
    %v44 = vld [vmem:[#allocation2] sm:$0xf]
    %v45 = vld [vmem:[#allocation2 + $0x4] sm:$0xf]
    %v46 = vld [vmem:[#allocation5] sm:$0xf]
    %v47 = vld [vmem:[#allocation5 + $0xc] sm:$0xf]
    %v48 = vld [vmem:[%s2] sm:$0x1]
    %v50 = vlaneseq
    %v51 = vshrl.u32 %v50, 7
    %v52 = vsub.s32 0, %v51
    %v53 = vrot.slane %v48, %v52
    %v57 = vunpack.c.l.b16 %v44
    %v58 = vunpack.c.l.b16 %v45
    %v59 = vpack.c.b16 %v58, %v57
    %v62 = vunpack.c.l.b16 %v46
    %v63 = vunpack.c.l.b16 %v47
    %v64 = vpack.c.b16 %v63, %v62
    %vm66 = vcmask 130048
    %v68 = vsel %vm66, %v59, 0
    %70 = vmatprep.subr.bf16.mxu0 0
    %71 = vmatpush1.bf16.msra.mxu0 0
    %72 = vmatprep.subr.bf16.mxu0 0
    %73 = vmatpush1.bf16.msra.mxu0 0
    %74 = vmatprep.subr.bf16.mxu0 0
    %75 = vmatpush1.bf16.msra.mxu0 0
    %76 = vmatprep.subr.bf16.mxu0 0
    %77 = vmatpush1.bf16.msra.mxu0 0
    %78 = vmatprep.subr.bf16.mxu0 0
    %79 = vmatpush1.bf16.msra.mxu0 0
    %80 = vmatprep.subr.bf16.mxu0 0
    %81 = vmatpush1.bf16.msra.mxu0 0
    %82 = vmatprep.subr.bf16.mxu0 0
    %83 = vmatpush1.bf16.msra.mxu0 0
    %84 = vmatprep.subr.bf16.mxu0 0
    %85 = vmatpush1.bf16.msra.mxu0 %v64
    %86 = vmatprep.subr.bf16.mxu0 0
    %87 = vmatpush2.bf16.msra.mxu0 0
    %88 = vmatprep.subr.bf16.mxu0 0
    %89 = vmatpush2.bf16.msra.mxu0 0
    %90 = vmatprep.subr.bf16.mxu0 0
    %91 = vmatpush2.bf16.msra.mxu0 0
    %92 = vmatprep.subr.bf16.mxu0 0
    %93 = vmatpush2.bf16.msra.mxu0 0
    %94 = vmatprep.subr.bf16.mxu0 0
    %95 = vmatpush2.bf16.msra.mxu0 0
    %96 = vmatprep.subr.bf16.mxu0 0
    %97 = vmatpush2.bf16.msra.mxu0 0
    %98 = vmatprep.subr.bf16.mxu0 0
    %99 = vmatpush2.bf16.msra.mxu0 0
    %100 = vmatprep.subr.bf16.mxu0 0
    %101 = vmatpush2.bf16.msra.mxu0 0
    %102 = vmatprep.mubr.bf16.mxu0 0
    %103 = vmatmul.mubr.bf16.gmra.mxu0 %v68
    %v104 = vpop.f32.mrf.mxu0
    %v105 = vadd.f32 %v53, %v104
    %v106 = vpop.f32.mrf.mxu0
    %v107 = vpop.f32.mrf.mxu0
    %v108 = vadd.f32 %v53, %v107
    %v109 = vpop.f32.mrf.mxu0
    %110 = vdwg.mxu0
    %v111 = vmax.f32 %v105, 0.0
    %v112 = vmax.f32 %v108, 0.0
    %v113 = vpack.c.bf16 %v112, %v111
    %v114 = vld [vmem:[#allocation5 + $0x4] sm:$0xf]
    %v115 = vld [vmem:[#allocation5 + $0x10] sm:$0xf]
    %v116 = vld [vmem:[#allocation5 + $0x1c] sm:$0xf]
    %v117 = vld [vmem:[#allocation5 + $0x28] sm:$0xf]
    %v118 = vld [vmem:[#allocation5 + $0x34] sm:$0xf]
    %v119 = vld [vmem:[#allocation5 + $0x40] sm:$0xf]
    %v120 = vld [vmem:[#allocation5 + $0x4c] sm:$0xf]
    %v121 = vld [vmem:[#allocation5 + $0x58] sm:$0xf]
    %v122 = vld [vmem:[#allocation5 + $0x64] sm:$0xf]
    %v123 = vld [vmem:[#allocation5 + $0x70] sm:$0xf]
    %v124 = vld [vmem:[#allocation5 + $0x7c] sm:$0xf]
    %v125 = vld [vmem:[#allocation5 + $0x88] sm:$0xf]
    %v126 = vld [vmem:[#allocation5 + $0x94] sm:$0xf]
    %v127 = vld [vmem:[#allocation5 + $0xa0] sm:$0xf]
    %v128 = vld [vmem:[#allocation5 + $0xac] sm:$0xf]
    %v129 = vld [vmem:[#allocation5 + $0xb8] sm:$0xf]
    %v130 = vld [vmem:[%s2 + $0x1] sm:$0x1]
    %v132 = vlaneseq
    %v133 = vshrl.u32 %v132, 7
    %v134 = vsub.s32 0, %v133
    %v135 = vrot.slane %v130, %v134
    %v153 = vunpack.c.l.b16 %v114
    %v154 = vunpack.c.l.b16 %v115
    %v155 = vunpack.c.l.b16 %v116
    %v156 = vunpack.c.l.b16 %v117
    %v157 = vunpack.c.l.b16 %v118
    %v158 = vunpack.c.l.b16 %v119
    %v159 = vunpack.c.l.b16 %v120
    %v160 = vunpack.c.l.b16 %v121
    %v161 = vunpack.c.l.b16 %v122
    %v162 = vunpack.c.l.b16 %v123
    %v163 = vunpack.c.l.b16 %v124
    %v164 = vunpack.c.l.b16 %v125
    %v165 = vunpack.c.l.b16 %v126
    %v166 = vunpack.c.l.b16 %v127
    %v167 = vunpack.c.l.b16 %v128
    %v168 = vunpack.c.l.b16 %v129
    %v169 = vpack.c.b16 %v154, %v153
    %v170 = vpack.c.b16 %v156, %v155
    %v171 = vpack.c.b16 %v158, %v157
    %v172 = vpack.c.b16 %v160, %v159
    %v173 = vpack.c.b16 %v162, %v161
    %v174 = vpack.c.b16 %v164, %v163
    %v175 = vpack.c.b16 %v166, %v165
    %v176 = vpack.c.b16 %v168, %v167
    %185 = vmatprep.subr.bf16.mxu0 0
    %186 = vmatpush1.bf16.msra.mxu0 %v176
    %187 = vmatprep.subr.bf16.mxu0 0
    %188 = vmatpush1.bf16.msra.mxu0 %v175
    %189 = vmatprep.subr.bf16.mxu0 0
    %190 = vmatpush1.bf16.msra.mxu0 %v174
    %191 = vmatprep.subr.bf16.mxu0 0
    %192 = vmatpush1.bf16.msra.mxu0 %v173
    %193 = vmatprep.subr.bf16.mxu0 0
    %194 = vmatpush1.bf16.msra.mxu0 %v172
    %195 = vmatprep.subr.bf16.mxu0 0
    %196 = vmatpush1.bf16.msra.mxu0 %v171
    %197 = vmatprep.subr.bf16.mxu0 0
    %198 = vmatpush1.bf16.msra.mxu0 %v170
    %199 = vmatprep.subr.bf16.mxu0 0
    %200 = vmatpush1.bf16.msra.mxu0 %v169
    %201 = vmatprep.subr.bf16.mxu0 0
    %202 = vmatpush2.bf16.msra.mxu0 0
    %203 = vmatprep.subr.bf16.mxu0 0
    %204 = vmatpush2.bf16.msra.mxu0 0
    %205 = vmatprep.subr.bf16.mxu0 0
    %206 = vmatpush2.bf16.msra.mxu0 0
    %207 = vmatprep.subr.bf16.mxu0 0
    %208 = vmatpush2.bf16.msra.mxu0 0
    %209 = vmatprep.subr.bf16.mxu0 0
    %210 = vmatpush2.bf16.msra.mxu0 0
    %211 = vmatprep.subr.bf16.mxu0 0
    %212 = vmatpush2.bf16.msra.mxu0 0
    %213 = vmatprep.subr.bf16.mxu0 0
    %214 = vmatpush2.bf16.msra.mxu0 0
    %215 = vmatprep.subr.bf16.mxu0 0
    %216 = vmatpush2.bf16.msra.mxu0 0
    %217 = vmatprep.mubr.bf16.mxu0 0
    %218 = vmatmul.mubr.bf16.gmra.mxu0 %v113
    %v219 = vpop.f32.mrf.mxu0
    %v220 = vadd.f32 %v135, %v219
    %v221 = vpop.f32.mrf.mxu0
    %v222 = vpop.f32.mrf.mxu0
    %v223 = vadd.f32 %v135, %v222
    %v224 = vpop.f32.mrf.mxu0
    %225 = vdwg.mxu0
    %v226 = vmax.f32 %v220, 0.0
    %v227 = vmax.f32 %v223, 0.0
    %v228 = vpack.c.bf16 %v227, %v226
    %v229 = vld [vmem:[#allocation5 + $0x8] sm:$0xf]
    %v230 = vld [vmem:[#allocation5 + $0x14] sm:$0xf]
    %v231 = vld [vmem:[#allocation5 + $0x20] sm:$0xf]
    %v232 = vld [vmem:[#allocation5 + $0x2c] sm:$0xf]
    %v233 = vld [vmem:[#allocation5 + $0x38] sm:$0xf]
    %v234 = vld [vmem:[#allocation5 + $0x44] sm:$0xf]
    %v235 = vld [vmem:[#allocation5 + $0x50] sm:$0xf]
    %v236 = vld [vmem:[#allocation5 + $0x5c] sm:$0xf]
    %v237 = vld [vmem:[#allocation5 + $0x68] sm:$0xf]
    %v238 = vld [vmem:[#allocation5 + $0x74] sm:$0xf]
    %v239 = vld [vmem:[#allocation5 + $0x80] sm:$0xf]
    %v240 = vld [vmem:[#allocation5 + $0x8c] sm:$0xf]
    %v241 = vld [vmem:[#allocation5 + $0x98] sm:$0xf]
    %v242 = vld [vmem:[#allocation5 + $0xa4] sm:$0xf]
    %v243 = vld [vmem:[#allocation5 + $0xb0] sm:$0xf]
    %v244 = vld [vmem:[#allocation5 + $0xbc] sm:$0xf]
    %v245 = vld [vmem:[%s2 + $0x2] sm:$0x1]
    %v247 = vlaneseq
    %v248 = vshrl.u32 %v247, 7
    %v249 = vsub.s32 0, %v248
    %v250 = vrot.slane %v245, %v249
    %v268 = vunpack.c.l.b16 %v229
    %v269 = vunpack.c.l.b16 %v230
    %v270 = vunpack.c.l.b16 %v231
    %v271 = vunpack.c.l.b16 %v232
    %v272 = vunpack.c.l.b16 %v233
    %v273 = vunpack.c.l.b16 %v234
    %v274 = vunpack.c.l.b16 %v235
    %v275 = vunpack.c.l.b16 %v236
    %v276 = vunpack.c.l.b16 %v237
    %v277 = vunpack.c.l.b16 %v238
    %v278 = vunpack.c.l.b16 %v239
    %v279 = vunpack.c.l.b16 %v240
    %v280 = vunpack.c.l.b16 %v241
    %v281 = vunpack.c.l.b16 %v242
    %v282 = vunpack.c.l.b16 %v243
    %v283 = vunpack.c.l.b16 %v244
    %v284 = vpack.c.b16 %v269, %v268
    %v285 = vpack.c.b16 %v271, %v270
    %v286 = vpack.c.b16 %v273, %v272
    %v287 = vpack.c.b16 %v275, %v274
    %v288 = vpack.c.b16 %v277, %v276
    %v289 = vpack.c.b16 %v279, %v278
    %v290 = vpack.c.b16 %v281, %v280
    %v291 = vpack.c.b16 %v283, %v282
    %300 = vmatprep.subr.bf16.mxu0 0
    %301 = vmatpush1.bf16.msra.mxu0 %v291
    %302 = vmatprep.subr.bf16.mxu0 0
    %303 = vmatpush1.bf16.msra.mxu0 %v290
    %304 = vmatprep.subr.bf16.mxu0 0
    %305 = vmatpush1.bf16.msra.mxu0 %v289
    %306 = vmatprep.subr.bf16.mxu0 0
    %307 = vmatpush1.bf16.msra.mxu0 %v288
    %308 = vmatprep.subr.bf16.mxu0 0
    %309 = vmatpush1.bf16.msra.mxu0 %v287
    %310 = vmatprep.subr.bf16.mxu0 0
    %311 = vmatpush1.bf16.msra.mxu0 %v286
    %312 = vmatprep.subr.bf16.mxu0 0
    %313 = vmatpush1.bf16.msra.mxu0 %v285
    %314 = vmatprep.subr.bf16.mxu0 0
    %315 = vmatpush1.bf16.msra.mxu0 %v284
    %316 = vmatprep.subr.bf16.mxu0 0
    %317 = vmatpush2.bf16.msra.mxu0 0
    %318 = vmatprep.subr.bf16.mxu0 0
    %319 = vmatpush2.bf16.msra.mxu0 0
    %320 = vmatprep.subr.bf16.mxu0 0
    %321 = vmatpush2.bf16.msra.mxu0 0
    %322 = vmatprep.subr.bf16.mxu0 0
    %323 = vmatpush2.bf16.msra.mxu0 0
    %324 = vmatprep.subr.bf16.mxu0 0
    %325 = vmatpush2.bf16.msra.mxu0 0
    %326 = vmatprep.subr.bf16.mxu0 0
    %327 = vmatpush2.bf16.msra.mxu0 0
    %328 = vmatprep.subr.bf16.mxu0 0
    %329 = vmatpush2.bf16.msra.mxu0 0
    %330 = vmatprep.subr.bf16.mxu0 0
    %331 = vmatpush2.bf16.msra.mxu0 0
    %332 = vmatprep.mubr.bf16.mxu0 0
    %333 = vmatmul.mubr.bf16.gmra.mxu0 %v228
    %v334 = vpop.f32.mrf.mxu0
    %v335 = vadd.f32 %v250, %v334
    %v336 = vpop.f32.mrf.mxu0
    %v337 = vpop.f32.mrf.mxu0
    %v338 = vadd.f32 %v250, %v337
    %v339 = vpop.f32.mrf.mxu0
    %340 = vdwg.mxu0
    %341 = vxpose.xlu0.b32.start [1/16] %v335, 128
    %342 = vxpose.xlu0.b32.cont [2/16] %v338, 128
    %343 = vxpose.xlu0.b32.cont [3/16] 0.0, 128
    %344 = vxpose.xlu0.b32.cont [4/16] 0.0, 128
    %345 = vxpose.xlu0.b32.cont [5/16] 0.0, 128
    %346 = vxpose.xlu0.b32.cont [6/16] 0.0, 128
    %347 = vxpose.xlu0.b32.cont [7/16] 0.0, 128
    %348 = vxpose.xlu0.b32.cont [8/16] 0.0, 128
    %349 = vxpose.xlu0.b32.cont [9/16] 0.0, 128
    %350 = vxpose.xlu0.b32.cont [10/16] 0.0, 128
    %351 = vxpose.xlu0.b32.cont [11/16] 0.0, 128
    %352 = vxpose.xlu0.b32.cont [12/16] 0.0, 128
    %353 = vxpose.xlu0.b32.cont [13/16] 0.0, 128
    %354 = vxpose.xlu0.b32.cont [14/16] 0.0, 128
    %355 = vxpose.xlu0.b32.cont [15/16] 0.0, 128
    %356 = vxpose.xlu0.b32.end [16/16] 0.0, 128
    %v357 = vpop.trf.xlu0
    %v358 = vpop.trf.xlu0
    %v359 = vpop.trf.xlu0
    %v360 = vpop.trf.xlu0
    %v361 = vpop.trf.xlu0
    %v362 = vpop.trf.xlu0
    %v363 = vpop.trf.xlu0
    %v364 = vpop.trf.xlu0
    %v365 = vpop.trf.xlu0
    %v366 = vpop.trf.xlu0
    %v367 = vpop.trf.xlu0
    %v368 = vpop.trf.xlu0
    %v369 = vpop.trf.xlu0
    %v370 = vpop.trf.xlu0
    %v371 = vpop.trf.xlu0
    %v372 = vpop.trf.xlu0
    %vm373 = vcmask 122880
    %374 = vst.msk [vmem:[#allocation7] sm:$0x1] %vm373, %v357
    // Predicated region
    $region22: #{tpu_custom_call.1} parent=1 // pred_check
      _
    $region23: #{tpu_custom_call.1} parent=1 // pred_check_branch
      %376 = sbr.rel (0) target = $region25
    $region24: #{tpu_custom_call.1} parent=1 // pred_region
      %s378 = ssub.s32 16, 16
      %379 = vsyncadd [#allocation4], %s378
      %s381 = sshll.u32 [#allocation7], 4
      %s382 = int_to_ptr.vmem [resolvable:$true] %s381
      %384 = dma.vmem_to_hbm [thread:$0]  %s382, 16, %s3, [#allocation4]
    $region25: #{tpu_custom_call.1} parent=1 // pred_fallthru
      _
    // Predicated region
    $region26: #{tpu_custom_call.1} parent=1 // pred_check
      _
    $region27: #{tpu_custom_call.1} parent=1 // pred_check_branch
      %386 = sbr.rel (0) target = $region29
    $region28: #{tpu_custom_call.1} parent=1 // pred_region
      %387 = dma.done [#allocation4], 16
    $region29: #{tpu_custom_call.1} parent=1 // pred_fallthru
      _
    %388 = vsyncpa [#allocation3], 1
    %389 = vsyncpa [#allocation6], 1
    %390 = vsyncpa [#allocation4], 1

</llo_original>
